<compile_context>
chip_gen: v5e
topology: v5e:2x2
jax: 0.10.0
libtpu: 0.0.40
codegen_flags: <defaults>
</compile_context>

<pallas_src>
import math

import jax
import jax.numpy as jnp
from jax.experimental import pallas as pl
from jax.experimental.pallas import tpu as pltpu


# -----------------------------------------------------------------------------
# Fused FFN kernel body.
# -----------------------------------------------------------------------------
def _ffn_kernel(x_ref, w1_ref, b1_ref, w2_ref, b2_ref, o_ref, acc_ref):
    f = pl.program_id(1)

    @pl.when(f == 0)
    def _():
        acc_ref[...] = jnp.zeros_like(acc_ref)

    # First GEMM block: (tm, d_model) @ (d_model, tf) -> f32 on the MXU.
    xb = x_ref[...].astype(w1_ref.dtype)          # bf16 operands, f32 accum
    h = jnp.dot(xb, w1_ref[...], preferred_element_type=jnp.float32)
    h = jnp.maximum(h + b1_ref[...], 0.0)         # bias + ReLU in f32
    # TODO(synk): dropout(p=0.1) would be applied to `h` here (identity in eval mode).

    # Second GEMM block: (tm, tf) @ (tf, d_model), accumulate into f32 scratch.
    acc_ref[...] += jnp.dot(h.astype(w2_ref.dtype), w2_ref[...],
                            preferred_element_type=jnp.float32)

    @pl.when(f == pl.num_programs(1) - 1)
    def _():
        o_ref[...] = (acc_ref[...] + b2_ref[...]).astype(o_ref.dtype)


# -----------------------------------------------------------------------------
# Tile selection (VMEM-budgeted, generation-safe).
# -----------------------------------------------------------------------------
_VMEM_BUDGET = 40 * 1024 * 1024     # tile working set; headroom under 48 MiB limit


def _round_up(v, m):
    return ((v + m - 1) // m) * m


def _vmem_estimate(tm, tf, d_model, x_bytes, w_bytes, out_bytes):
    x_b = 2 * tm * d_model * x_bytes            # double-buffered x tile
    w1_b = 2 * d_model * tf * w_bytes           # double-buffered W1 block
    w2_b = 2 * tf * d_model * w_bytes           # double-buffered W2 block
    bias_b = 2 * (tf + d_model) * 4
    acc_b = tm * d_model * 4                    # f32 accumulator scratch
    out_b = 2 * tm * d_model * out_bytes        # double-buffered output tile
    return x_b + w1_b + w2_b + bias_b + acc_b + out_b


def _select_tiles(M, d_model, d_ff, x_bytes, w_bytes, out_bytes):
    # Row tile: keep >=2 parallel blocks when M is large (v7x megacore),
    # otherwise one (padded) block.
    if M <= 256:
        m_pad = _round_up(max(M, 8), 8)
        tm = m_pad
    else:
        m_pad = _round_up(M, 256)
        tm = 256

    # d_ff tile: largest MXU-friendly divisor that fits the VMEM budget.
    divisors = [t for t in (2048, 1024, 512, 256, 128) if d_ff >= t and d_ff % t == 0]
    if not divisors:
        divisors = [d_ff]                       # small / ragged d_ff: full block
    tf = divisors[-1]                           # smallest as safety fallback
    for cand in divisors:
        if _vmem_estimate(tm, cand, d_model, x_bytes, w_bytes, out_bytes) <= _VMEM_BUDGET:
            tf = cand
            break
    return m_pad, tm, tf


# -----------------------------------------------------------------------------
# pallas_call wrapper: y = relu(x2d @ w1_t + b1) @ w2_t + b2
#   x2d  : (M, d_model)        (any float dtype; cast to bf16 inside the kernel)
#   w1_t : (d_model, d_ff) bf16, w2_t : (d_ff, d_model) bf16
#   b1   : (1, d_ff) f32,        b2   : (1, d_model) f32
# -----------------------------------------------------------------------------
def pallas_ffn(x2d, w1_t, b1, w2_t, b2, out_dtype):
    M, d_model = x2d.shape
    d_ff = w1_t.shape[1]

    x_bytes = jnp.dtype(x2d.dtype).itemsize
    w_bytes = jnp.dtype(w1_t.dtype).itemsize
    out_bytes = jnp.dtype(out_dtype).itemsize
    m_pad, tm, tf = _select_tiles(M, d_model, d_ff, x_bytes, w_bytes, out_bytes)

    if m_pad != M:
        x2d = jnp.pad(x2d, ((0, m_pad - M), (0, 0)))

    grid = (m_pad // tm, d_ff // tf)

    cost = pl.CostEstimate(
        flops=4 * M * d_ff * d_model,            # two GEMMs
        transcendentals=0,
        bytes_accessed=(M * d_model * x_bytes
                        + 2 * d_model * d_ff * w_bytes
                        + (d_ff + d_model) * 4
                        + M * d_model * out_bytes),
    )

    out = pl.pallas_call(
        _ffn_kernel,
        out_shape=jax.ShapeDtypeStruct((m_pad, d_model), out_dtype),
        grid=grid,
        in_specs=[
            pl.BlockSpec((tm, d_model), lambda i, f: (i, 0)),   # x tile (f-invariant)
            pl.BlockSpec((d_model, tf), lambda i, f: (0, f)),   # W1 block
            pl.BlockSpec((1, tf),       lambda i, f: (0, f)),   # b1 block
            pl.BlockSpec((tf, d_model), lambda i, f: (f, 0)),   # W2 block
            pl.BlockSpec((1, d_model),  lambda i, f: (0, 0)),   # b2 (resident)
        ],
        out_specs=pl.BlockSpec((tm, d_model), lambda i, f: (i, 0)),
        scratch_shapes=[pltpu.VMEM((tm, d_model), jnp.float32)],
        compiler_params=pltpu.CompilerParams(
            dimension_semantics=("parallel", "arbitrary"),
            vmem_limit_bytes=48 * 1024 * 1024,
        ),
        cost_estimate=cost,
    )(x2d, w1_t, b1, w2_t, b2)

    return out[:M] if m_pad != M else out


# -----------------------------------------------------------------------------
# Module wrapper (parameter setup once at init; no per-call relayouts).
# -----------------------------------------------------------------------------
class PositionwiseFeedForwardPallas:
    def __init__(self, d_model, d_ff, key, dropout=0.1, compute_dtype=jnp.bfloat16):
        self.d_model = d_model
        self.d_ff = d_ff
        self.dropout = dropout            # identity at inference
        self.compute_dtype = compute_dtype

        # f32 master parameters, nn.Linear-style init: U(-1/sqrt(fan_in), 1/sqrt(fan_in)).
        k1, k2, k3, k4 = jax.random.split(key, 4)
        bound1 = 1.0 / math.sqrt(d_model)
        bound2 = 1.0 / math.sqrt(d_ff)
        self.w1 = jax.random.uniform(k1, (d_ff, d_model), jnp.float32, -bound1, bound1)
        self.b1 = jax.random.uniform(k2, (d_ff,), jnp.float32, -bound1, bound1)
        self.w2 = jax.random.uniform(k3, (d_model, d_ff), jnp.float32, -bound2, bound2)
        self.b2 = jax.random.uniform(k4, (d_model,), jnp.float32, -bound2, bound2)

        # Kernel-ready parameters, prepared once:
        #  * weights pre-transposed to (in, out) and stored bf16 (MXU-native)
        #  * biases pre-shaped to (1, N) f32 (added in the f32 epilogue)
        self.w1_t = self.w1.T.astype(compute_dtype)            # (d_model, d_ff)
        self.w2_t = self.w2.T.astype(compute_dtype)            # (d_ff, d_model)
        self.b1_row = self.b1.reshape(1, d_ff).astype(jnp.float32)
        self.b2_row = self.b2.reshape(1, d_model).astype(jnp.float32)

    def __call__(self, x):
        B, S, _ = x.shape
        x2d = x.reshape(B * S, self.d_model)
        y = pallas_ffn(x2d, self.w1_t, self.b1_row, self.w2_t, self.b2_row,
                       out_dtype=x.dtype)
        return y.reshape(B, S, self.d_model)


# -----------------------------------------------------------------------------
# Pure-JAX f32 reference (mirrors the PyTorch forward, eval-mode dropout).
# -----------------------------------------------------------------------------
def reference_ffn(mod, x):
    h = jnp.maximum(x @ mod.w1.T + mod.b1, 0.0)
    return h @ mod.w2.T + mod.b2


if __name__ == "__main__":
    root = jax.random.PRNGKey(0)
    kx, kp, kx2, kp2 = jax.random.split(root, 4)

    # --- Small-shape check (single full-block path) --------------------------
    B, S, d_model, d_ff = 2, 8, 32, 64
    x = jax.random.normal(kx, (B, S, d_model), jnp.float32)
    mod = PositionwiseFeedForwardPallas(d_model, d_ff, kp)
    out = jax.block_until_ready(mod(x))
    ref = reference_ffn(mod, x)
    assert out.shape == (B, S, d_model)
    # bf16 operands / f32 accumulation -> relaxed tolerance vs f32 reference.
    assert jnp.allclose(out, ref, atol=2e-2, rtol=2e-2), \
        float(jnp.max(jnp.abs(out - ref)))

    # --- Tiled-path check: 256-row tiles, multi-step d_ff accumulation,
    #     pl.when init/finalize, 2-block parallel axis -------------------------
    B2, S2, d_model2, d_ff2 = 2, 256, 512, 4096
    x2 = jax.random.normal(kx2, (B2, S2, d_model2), jnp.float32)
    mod2 = PositionwiseFeedForwardPallas(d_model2, d_ff2, kp2)
    out2 = jax.block_until_ready(mod2(x2))
    ref2 = reference_ffn(mod2, x2)
    assert out2.shape == (B2, S2, d_model2)
    assert jnp.allclose(out2, ref2, atol=2e-2, rtol=2e-2), \
        float(jnp.max(jnp.abs(out2 - ref2)))

    print("KERNEL_OK")
</pallas_src>

<mosaic_0001>
module attributes {stable_mosaic.version = 11 : i64} {
  func.func @_ffn_kernel(%arg0: i32, %arg1: i32, %arg2: memref<16x32xf32, #tpu.memory_space<vmem>>, %arg3: memref<32x64xbf16, #tpu.memory_space<vmem>>, %arg4: memref<1x64xf32, #tpu.memory_space<vmem>>, %arg5: memref<64x32xbf16, #tpu.memory_space<vmem>>, %arg6: memref<1x32xf32, #tpu.memory_space<vmem>>, %arg7: memref<16x32xf32, #tpu.memory_space<vmem>>, %arg8: memref<16x32xf32, #tpu.memory_space<vmem>>) attributes {dimension_semantics = [#tpu.dimension_semantics<parallel>, #tpu.dimension_semantics<arbitrary>], iteration_bounds = array<i64: 1, 1>, scalar_prefetch = 0 : i64, scratch_operands = 1 : i64, tpu.core_type = #tpu.core_type<tc>, window_params = [{transform_indices = @transform_0, window_bounds = array<i64: 16, 32>}, {transform_indices = @transform_1, window_bounds = array<i64: 32, 64>}, {transform_indices = @transform_2, window_bounds = array<i64: 1, 64>}, {transform_indices = @transform_3, window_bounds = array<i64: 64, 32>}, {pipeline_mode = #tpu.pipeline_mode<synchronous>, transform_indices = @transform_4, window_bounds = array<i64: 1, 32>}, {transform_indices = @transform_5, window_bounds = array<i64: 16, 32>}]} {
    %c0_i32 = arith.constant 0 : i32
    %0 = arith.cmpi eq, %arg1, %c0_i32 : i32
    %1 = arith.extui %0 : i1 to i32
    %c0_i32_0 = arith.constant 0 : i32
    %2 = arith.cmpi ne, %1, %c0_i32_0 : i32
    scf.if %2 {
      %cst_16 = arith.constant 0.000000e+00 : f32
      %21 = vector.broadcast %cst_16 : f32 to vector<16x32xf32>
      %c0_17 = arith.constant 0 : index
      %c0_18 = arith.constant 0 : index
      %22 = vector.load %arg8[%c0_17, %c0_18] : memref<16x32xf32, #tpu.memory_space<vmem>>, vector<16x32xf32>
      tpu.vector_store %arg8[%c0_17, %c0_18], %21 {strides = array<i32>} : memref<16x32xf32, #tpu.memory_space<vmem>>, vector<16x32xf32>,
    } else {
    }
    %c0 = arith.constant 0 : index
    %c0_1 = arith.constant 0 : index
    %3 = vector.load %arg2[%c0, %c0_1] : memref<16x32xf32, #tpu.memory_space<vmem>>, vector<16x32xf32>
    %4 = arith.truncf %3 : vector<16x32xf32> to vector<16x32xbf16>
    %c0_2 = arith.constant 0 : index
    %c0_3 = arith.constant 0 : index
    %5 = vector.load %arg3[%c0_2, %c0_3] : memref<32x64xbf16, #tpu.memory_space<vmem>>, vector<32x64xbf16>
    %cst = arith.constant dense<0.000000e+00> : vector<16x64xf32>
    %6 = tpu.matmul %4, %5, %cst {dimension_numbers = #tpu.dot_dimension_numbers<[1], [0], [0], [1], [0, 0, 1, 1], [], []>} : vector<16x32xbf16>, vector<32x64xbf16>, vector<16x64xf32> -> vector<16x64xf32>
    %c0_4 = arith.constant 0 : index
    %c0_5 = arith.constant 0 : index
    %7 = vector.load %arg4[%c0_4, %c0_5] : memref<1x64xf32, #tpu.memory_space<vmem>>, vector<1x64xf32>
    %8 = vector.broadcast %7 : vector<1x64xf32> to vector<16x64xf32>
    %9 = arith.addf %6, %8 : vector<16x64xf32>
    %cst_6 = arith.constant 0.000000e+00 : f32
    %10 = vector.broadcast %cst_6 : f32 to vector<16x64xf32>
    %11 = arith.maximumf %9, %10 : vector<16x64xf32>
    %c0_7 = arith.constant 0 : index
    %c0_8 = arith.constant 0 : index
    %12 = vector.load %arg8[%c0_7, %c0_8] : memref<16x32xf32, #tpu.memory_space<vmem>>, vector<16x32xf32>
    %13 = arith.truncf %11 : vector<16x64xf32> to vector<16x64xbf16>
    %c0_9 = arith.constant 0 : index
    %c0_10 = arith.constant 0 : index
    %14 = vector.load %arg5[%c0_9, %c0_10] : memref<64x32xbf16, #tpu.memory_space<vmem>>, vector<64x32xbf16>
    %cst_11 = arith.constant dense<0.000000e+00> : vector<16x32xf32>
    %15 = tpu.matmul %13, %14, %cst_11 {dimension_numbers = #tpu.dot_dimension_numbers<[1], [0], [0], [1], [0, 0, 1, 1], [], []>} : vector<16x64xbf16>, vector<64x32xbf16>, vector<16x32xf32> -> vector<16x32xf32>
    %16 = arith.addf %12, %15 : vector<16x32xf32>
    %c0_12 = arith.constant 0 : index
    %c0_13 = arith.constant 0 : index
    %17 = vector.load %arg8[%c0_12, %c0_13] : memref<16x32xf32, #tpu.memory_space<vmem>>, vector<16x32xf32>
    tpu.vector_store %arg8[%c0_12, %c0_13], %16 {strides = array<i32>} : memref<16x32xf32, #tpu.memory_space<vmem>>, vector<16x32xf32>,
    %c0_i32_14 = arith.constant 0 : i32
    %18 = arith.cmpi eq, %arg1, %c0_i32_14 : i32
    %19 = arith.extui %18 : i1 to i32
    %c0_i32_15 = arith.constant 0 : i32
    %20 = arith.cmpi ne, %19, %c0_i32_15 : i32
    scf.if %20 {
      %c0_16 = arith.constant 0 : index
      %c0_17 = arith.constant 0 : index
      %21 = vector.load %arg8[%c0_16, %c0_17] : memref<16x32xf32, #tpu.memory_space<vmem>>, vector<16x32xf32>
      %c0_18 = arith.constant 0 : index
      %c0_19 = arith.constant 0 : index
      %22 = vector.load %arg6[%c0_18, %c0_19] : memref<1x32xf32, #tpu.memory_space<vmem>>, vector<1x32xf32>
      %23 = vector.broadcast %22 : vector<1x32xf32> to vector<16x32xf32>
      %24 = arith.addf %21, %23 : vector<16x32xf32>
      %c0_20 = arith.constant 0 : index
      %c0_21 = arith.constant 0 : index
      %25 = vector.load %arg7[%c0_20, %c0_21] : memref<16x32xf32, #tpu.memory_space<vmem>>, vector<16x32xf32>
      tpu.vector_store %arg7[%c0_20, %c0_21], %24 {strides = array<i32>} : memref<16x32xf32, #tpu.memory_space<vmem>>, vector<16x32xf32>,
    } else {
    }
    return
  }
  func.func @transform_0(%arg0: i32, %arg1: i32) -> (i32, i32) {
    %c0_i32 = arith.constant 0 : i32
    %c0_i32_0 = arith.constant 0 : i32
    return %arg0, %c0_i32 : i32, i32
  }
  func.func @transform_1(%arg0: i32, %arg1: i32) -> (i32, i32) {
    %c0_i32 = arith.constant 0 : i32
    %c0_i32_0 = arith.constant 0 : i32
    return %c0_i32, %arg1 : i32, i32
  }
  func.func @transform_2(%arg0: i32, %arg1: i32) -> (i32, i32) {
    %c0_i32 = arith.constant 0 : i32
    %c0_i32_0 = arith.constant 0 : i32
    return %c0_i32, %arg1 : i32, i32
  }
  func.func @transform_3(%arg0: i32, %arg1: i32) -> (i32, i32) {
    %c0_i32 = arith.constant 0 : i32
    %c0_i32_0 = arith.constant 0 : i32
    return %arg1, %c0_i32 : i32, i32
  }
  func.func @transform_4(%arg0: i32, %arg1: i32) -> (i32, i32) {
    %c0_i32 = arith.constant 0 : i32
    %c0_i32_0 = arith.constant 0 : i32
    %c0_i32_1 = arith.constant 0 : i32
    return %c0_i32, %c0_i32_0 : i32, i32
  }
  func.func @transform_5(%arg0: i32, %arg1: i32) -> (i32, i32) {
    %c0_i32 = arith.constant 0 : i32
    %c0_i32_0 = arith.constant 0 : i32
    return %arg0, %c0_i32 : i32, i32
  }
}

</mosaic_0001>

<llo_original>
// kernel: tpu_custom_call.1
$region0: #{tpu_custom_call.1}
  #allocation0 [shape = 'u32[]', space=smem, size = 0x4, offset = 0x4, fixed_abs, tag = 'smem constant byte address 0x4 - core index']
  #allocation1 [shape = 'u32[72,128]{1,0:T(1,128)}', space=vmem, size = 0x9000, scoped, tag = 'internal scratch']
  #allocation2 [shape = 'f32[16,32]{1,0:T(8,128)}', space=vmem, size = 0x2000, scoped, tag = 'scratch operand']
  %s0 = inlined_call_operand.vmem [shape: f32[16,32], index: 0, kind: input, shape index: {}]
  %s1 = inlined_call_operand.vmem [shape: bf16[32,64], index: 1, kind: input, shape index: {}]
  %s2 = inlined_call_operand.vmem [shape: f32[1,64], index: 2, kind: input, shape index: {}]
  %s3 = inlined_call_operand.vmem [shape: bf16[64,32], index: 3, kind: input, shape index: {}]
  %s4 = inlined_call_operand.vmem [shape: f32[1,32], index: 4, kind: input, shape index: {}]
  %s5 = inlined_call_operand.hbm [shape: f32[16,32], index: 5, kind: output, shape index: {}]
  %s6 = sld [smem:[#allocation0]]
  $region38: #{tpu_custom_call.1} parent=0
    _
  %s8 = ssub.s32 1, %s6
  %s9 = scalar_select 0, %s8, %s6
  $region1: #{tpu_custom_call.1} parent=0
    #allocation3 [shape = 'u8[8192]{0}', space=vmem, size = 0x2000, scoped, tag = 'output window, operand 0, single buffered']
    #allocation4 [shape = 's32[1]{0}', space=sflag, size = 0x4, scoped, tag = 'scoped memory for tpu_custom_call.1']
    %10 = vsyncpa [#allocation4], 0
    // Predicated region
    $region2: #{tpu_custom_call.1} parent=1 // pred_check
      _
    $region3: #{tpu_custom_call.1} parent=1 // pred_check_branch
      %12 = sbr.rel (0) target = $region5
    $region4: #{tpu_custom_call.1} parent=1 // pred_region
      _
    $region5: #{tpu_custom_call.1} parent=1 // pred_fallthru
      _
    // Predicated region
    $region6: #{tpu_custom_call.1} parent=1 // pred_check
      _
    $region7: #{tpu_custom_call.1} parent=1 // pred_check_branch
      %14 = sbr.rel (0) target = $region9
    $region8: #{tpu_custom_call.1} parent=1 // pred_region
      _
    $region9: #{tpu_custom_call.1} parent=1 // pred_fallthru
      _
    // Predicated region
    $region10: #{tpu_custom_call.1} parent=1 // pred_check
      _
    $region11: #{tpu_custom_call.1} parent=1 // pred_check_branch
      %16 = sbr.rel (0) target = $region13
    $region12: #{tpu_custom_call.1} parent=1 // pred_region
      _
    $region13: #{tpu_custom_call.1} parent=1 // pred_fallthru
      _
    // Predicated region
    $region14: #{tpu_custom_call.1} parent=1 // pred_check
      _
    $region15: #{tpu_custom_call.1} parent=1 // pred_check_branch
      %18 = sbr.rel (0) target = $region17
    $region16: #{tpu_custom_call.1} parent=1 // pred_region
      _
    $region17: #{tpu_custom_call.1} parent=1 // pred_fallthru
      _
    // Predicated region
    $region18: #{tpu_custom_call.1} parent=1 // pred_check
      _
    $region19: #{tpu_custom_call.1} parent=1 // pred_check_branch
      %20 = sbr.rel (0) target = $region21
    $region20: #{tpu_custom_call.1} parent=1 // pred_region
      _
    $region21: #{tpu_custom_call.1} parent=1 // pred_fallthru
      _
    %p22 = scmp.eq.s32.totalorder 0, 0
    // Predicated region
    $region22: #{tpu_custom_call.1} parent=1 // pred_check
      %p23 = pneg %p22
    $region23: #{tpu_custom_call.1} parent=1 // pred_check_branch
      %25 = sbr.rel (%p23) target = $region25
    $region24: #{tpu_custom_call.1} parent=1 // pred_region
      %vm26 = vcmask 261120
      %27 = vst.msk [vmem:[#allocation2] sm:$0xff] %vm26, 0.0
      %28 = vst.msk [vmem:[#allocation2 + $0x8] sm:$0xff] %vm26, 0.0
    $region25: #{tpu_custom_call.1} parent=1 // pred_fallthru
      _
    %v29 = vld [vmem:[%s0] sm:$0xff]
    %v30 = vld [vmem:[%s0 + $0x8] sm:$0xff]
    %v31 = vpack.c.bf16 %v30, %v29
    %v32 = vld [vmem:[%s1] sm:$0xf]
    %v33 = vld [vmem:[%s1 + $0x4] sm:$0xf]
    %v34 = vld [vmem:[%s1 + $0x8] sm:$0xf]
    %v35 = vld [vmem:[%s1 + $0xc] sm:$0xf]
    %v36 = vld [vmem:[%s2] sm:$0x1]
    %v38 = vperm.slane %v36, 0
    %v44 = vunpack.c.l.b16 %v32
    %v45 = vunpack.c.l.b16 %v33
    %v46 = vunpack.c.l.b16 %v34
    %v47 = vunpack.c.l.b16 %v35
    %v48 = vpack.c.b16 %v45, %v44
    %v49 = vpack.c.b16 %v47, %v46
    %vm52 = vcmask 261120
    %v54 = vsel %vm52, %v31, 0
    %56 = vmatpush.bf16.msra.mxu0 0
    %57 = vmatpush.bf16.msra.mxu0 0
    %58 = vmatpush.bf16.msra.mxu0 0
    %59 = vmatpush.bf16.msra.mxu0 0
    %60 = vmatpush.bf16.msra.mxu0 0
    %61 = vmatpush.bf16.msra.mxu0 0
    %62 = vmatpush.bf16.msra.mxu0 %v49
    %63 = vmatpush.bf16.msra.mxu0 %v48
    %64 = vmatmul.bf16.gmra.mxu0 %v54
    %v65 = vpop.f32.mrf.mxu0
    %v66 = vadd.f32 %v38, %v65
    %v67 = vpop.f32.mrf.mxu0
    %v68 = vadd.f32 %v38, %v67
    %69 = vdwg.mxu0
    %v70 = vmax.f32 %v66, 0.0
    %v71 = vmax.f32 %v68, 0.0
    %v72 = vld [vmem:[#allocation2] sm:$0xff]
    %v73 = vld [vmem:[#allocation2 + $0x8] sm:$0xff]
    %v74 = vpack.c.bf16 %v71, %v70
    %v75 = vld [vmem:[%s3] sm:$0xf]
    %v76 = vld [vmem:[%s3 + $0x4] sm:$0xf]
    %v77 = vld [vmem:[%s3 + $0x8] sm:$0xf]
    %v78 = vld [vmem:[%s3 + $0xc] sm:$0xf]
    %v79 = vld [vmem:[%s3 + $0x10] sm:$0xf]
    %v80 = vld [vmem:[%s3 + $0x14] sm:$0xf]
    %v81 = vld [vmem:[%s3 + $0x18] sm:$0xf]
    %v82 = vld [vmem:[%s3 + $0x1c] sm:$0xf]
    %v91 = vunpack.c.l.b16 %v75
    %v92 = vunpack.c.l.b16 %v76
    %v93 = vunpack.c.l.b16 %v77
    %v94 = vunpack.c.l.b16 %v78
    %v95 = vunpack.c.l.b16 %v79
    %v96 = vunpack.c.l.b16 %v80
    %v97 = vunpack.c.l.b16 %v81
    %v98 = vunpack.c.l.b16 %v82
    %v99 = vpack.c.b16 %v92, %v91
    %v100 = vpack.c.b16 %v94, %v93
    %v101 = vpack.c.b16 %v96, %v95
    %v102 = vpack.c.b16 %v98, %v97
    %vm107 = vcmask 523264
    %v109 = vsel %vm107, %v74, 0
    %111 = vmatpush.bf16.msra.mxu0 0
    %112 = vmatpush.bf16.msra.mxu0 0
    %113 = vmatpush.bf16.msra.mxu0 0
    %114 = vmatpush.bf16.msra.mxu0 0
    %115 = vmatpush.bf16.msra.mxu0 %v102
    %116 = vmatpush.bf16.msra.mxu0 %v101
    %117 = vmatpush.bf16.msra.mxu0 %v100
    %118 = vmatpush.bf16.msra.mxu0 %v99
    %119 = vmatmul.bf16.gmra.mxu0 %v109
    %v120 = vpop.f32.mrf.mxu0
    %v121 = vadd.f32 0.0, %v120
    %v122 = vpop.f32.mrf.mxu0
    %v123 = vadd.f32 0.0, %v122
    %124 = vdwg.mxu0
    %v125 = vadd.f32 %v72, %v121
    %v126 = vadd.f32 %v73, %v123
    %127 = vst.msk [vmem:[#allocation2] sm:$0xff] %vm52, %v125
    %128 = vst.msk [vmem:[#allocation2 + $0x8] sm:$0xff] %vm52, %v126
    // Predicated region
    $region26: #{tpu_custom_call.1} parent=1 // pred_check
      %p129 = pneg %p22
    $region27: #{tpu_custom_call.1} parent=1 // pred_check_branch
      %131 = sbr.rel (%p129) target = $region29
    $region28: #{tpu_custom_call.1} parent=1 // pred_region
      %v132 = vld [vmem:[#allocation2] sm:$0xff]
      %v133 = vld [vmem:[#allocation2 + $0x8] sm:$0xff]
      %v134 = vld [vmem:[%s4] sm:$0x1]
      %v136 = vperm.slane %v134, 0
      %v138 = vadd.f32 %v132, %v136
      %v139 = vadd.f32 %v133, %v136
      %140 = vst.msk [vmem:[#allocation3] sm:$0xff] %vm52, %v138
      %141 = vst.msk [vmem:[#allocation3 + $0x8] sm:$0xff] %vm52, %v139
    $region29: #{tpu_custom_call.1} parent=1 // pred_fallthru
      _
    // Predicated region
    $region30: #{tpu_custom_call.1} parent=1 // pred_check
      _
    $region31: #{tpu_custom_call.1} parent=1 // pred_check_branch
      %143 = sbr.rel (0) target = $region33
    $region32: #{tpu_custom_call.1} parent=1 // pred_region
      %145 = vsyncadd [#allocation4], 0
      %s146 = sshll.u32 [#allocation3], 4
      %s147 = int_to_ptr.vmem [resolvable:$true] %s146
      %s148 = sshll.u32 %s5, 4
      %s149 = int_to_ptr.hbm [resolvable:$true] %s148
      %154 = dma.vmem_to_hbm [thread:$0]  %s147, 256, %s149, [#allocation4], 128, 128, 8
    $region33: #{tpu_custom_call.1} parent=1 // pred_fallthru
      _
    // Predicated region
    $region34: #{tpu_custom_call.1} parent=1 // pred_check
      _
    $region35: #{tpu_custom_call.1} parent=1 // pred_check_branch
      %156 = sbr.rel (0) target = $region37
    $region36: #{tpu_custom_call.1} parent=1 // pred_region
      %158 = dma.done [#allocation4], 256
    $region37: #{tpu_custom_call.1} parent=1 // pred_fallthru
      _
    %159 = vsyncpa [#allocation4], 1

</llo_original>
